<compile_context>
chip_gen: v7x
topology: tpu7x:2x2x1
jax: 0.10.0
libtpu: 0.0.40
codegen_flags: <defaults>
</compile_context>

<pallas_src>
import numpy as np
import jax
import jax.numpy as jnp
from jax.experimental import pallas as pl
from jax.experimental.pallas import tpu as pltpu


def _round_up(x, m):
    return (x + m - 1) // m * m


# -----------------------------------------------------------------------------
# Pallas kernel: (optional proj) -> streamed linear -> online log_softmax
#                -> gather(raw logit at col) - lse
# Grid: (row_tiles [parallel], vocab_tiles [arbitrary, innermost]).
# -----------------------------------------------------------------------------
def _make_cluster_kernel(has_proj, num_v, tile_v):
    def kernel(flags_ref, *refs):
        if has_proj:
            (hid_ref, proj_ref, wt_ref, b_ref, col_ref,
             out_ref, hproj_scr, m_scr, l_scr, acc_scr) = refs
        else:
            (hid_ref, wt_ref, b_ref, col_ref,
             out_ref, m_scr, l_scr, acc_scr) = refs
            proj_ref = hproj_scr = None

        i = pl.program_id(0)
        v = pl.program_id(1)
        active = flags_ref[i] > 0          # does this row tile hold cluster rows?

        @pl.when(active)
        def _compute():
            @pl.when(v == 0)
            def _init():
                m_scr[...] = jnp.full(m_scr.shape, -jnp.inf, jnp.float32)
                l_scr[...] = jnp.zeros_like(l_scr)
                acc_scr[...] = jnp.zeros_like(acc_scr)
                if has_proj:
                    # Projection hoisted out of the vocab loop: once per row tile.
                    hp = jnp.dot(hid_ref[...], proj_ref[...],
                                 preferred_element_type=jnp.float32)
                    hproj_scr[...] = hp.astype(jnp.bfloat16)

            h = hproj_scr[...] if has_proj else hid_ref[...]
            # bf16 x bf16 -> f32 on the MXU; bias add + softmax math in f32.
            logits = jnp.dot(h, wt_ref[...],
                             preferred_element_type=jnp.float32) + b_ref[...]

            # Online log-softmax update (running max / running sum-exp).
            m_prev = m_scr[...]
            m_new = jnp.maximum(m_prev, jnp.max(logits, axis=-1, keepdims=True))
            l_scr[...] = (jnp.exp(m_prev - m_new) * l_scr[...]
                          + jnp.sum(jnp.exp(logits - m_new), axis=-1, keepdims=True))
            m_scr[...] = m_new

            # Gather the RAW logit at the (global) target column; the target
            # column falls in at most one vocab tile, padded columns never match.
            cols = jax.lax.broadcasted_iota(jnp.int32, logits.shape, 1) + v * tile_v
            acc_scr[...] += jnp.sum(
                jnp.where(cols == col_ref[...], logits, 0.0),
                axis=-1, keepdims=True)

        @pl.when(v == num_v - 1)
        def _finalize():
            @pl.when(active)
            def _():
                # logprob[target] = logit[target] - lse
                out_ref[...] = acc_scr[...] - (m_scr[...] + jnp.log(l_scr[...]))

            @pl.when(jnp.logical_not(active))
            def _():
                out_ref[...] = jnp.zeros_like(out_ref)

    return kernel


def _cluster_logprob_gather(hidden_bf, cluster, col, row_range, *, tile_n=256):
    """Per-row logprob[n, col[n]] for one cluster, streamed over the vocab.

    row_range: (start, end) of rows (in the cluster-sorted order) belonging to
    this cluster, or None for "all rows active" (head / single-cluster case).
    """
    N, d_proj = hidden_bf.shape
    weight_t = cluster["weight_t"]          # [d_emb, Vp] bf16 (pre-transposed/padded)
    bias = cluster["bias"]                  # [1, Vp] f32 (padded cols = -1e30)
    proj = cluster["proj"]                  # [d_proj, d_emb] bf16 or None
    tile_v = cluster["tile_v"]
    d_emb, Vp = weight_t.shape
    num_v = Vp // tile_v
    has_proj = proj is not None

    # Row tiling (MXU aligned, clamped for tiny inputs).
    tn = min(tile_n, _round_up(N, 8))
    n_pad = (-N) % tn
    if n_pad:
        hidden_bf = jnp.pad(hidden_bf, ((0, n_pad), (0, 0)))
        col = jnp.pad(col, (0, n_pad))
    Np = N + n_pad
    num_rt = Np // tn

    # Per-row-tile activity flags (scalar-prefetched into SMEM).
    tile_starts = jnp.arange(num_rt, dtype=jnp.int32) * tn
    if row_range is None:
        flags = jnp.ones((num_rt,), jnp.int32)
    else:
        start, end = row_range
        flags = ((end > start)
                 & (tile_starts < end)
                 & (tile_starts + tn > start)).astype(jnp.int32)

    col2 = col.reshape(Np, 1).astype(jnp.int32)

    # Inactive row tiles pin the weight/bias block index to 0 so the weight
    # stream is not re-DMA'd for tiles whose compute is skipped.
    in_specs = [pl.BlockSpec((tn, d_proj), lambda i, v, f: (i, 0))]
    args = [hidden_bf]
    if has_proj:
        in_specs.append(pl.BlockSpec((d_proj, d_emb), lambda i, v, f: (0, 0)))
        args.append(proj)
    in_specs += [
        pl.BlockSpec((d_emb, tile_v), lambda i, v, f: (0, v * f[i])),
        pl.BlockSpec((1, tile_v), lambda i, v, f: (0, v * f[i])),
        pl.BlockSpec((tn, 1), lambda i, v, f: (i, 0)),
    ]
    args += [weight_t, bias, col2]

    scratch = []
    if has_proj:
        scratch.append(pltpu.VMEM((tn, d_emb), jnp.bfloat16))
    scratch += [pltpu.VMEM((tn, 1), jnp.float32)] * 3   # m, l, gathered logit

    grid_spec = pltpu.PrefetchScalarGridSpec(
        num_scalar_prefetch=1,
        grid=(num_rt, num_v),
        in_specs=in_specs,
        out_specs=pl.BlockSpec((tn, 1), lambda i, v, f: (i, 0)),
        scratch_shapes=scratch,
    )
    out = pl.pallas_call(
        _make_cluster_kernel(has_proj, num_v, tile_v),
        out_shape=jax.ShapeDtypeStruct((Np, 1), jnp.float32),
        grid_spec=grid_spec,
        compiler_params=pltpu.CompilerParams(
            dimension_semantics=("parallel", "arbitrary"),
            vmem_limit_bytes=48 * 1024 * 1024,
        ),
    )(flags, *args)
    return out[:N, 0]


# -----------------------------------------------------------------------------
# Parameter construction (mirrors the PyTorch __init__ shapes)
# -----------------------------------------------------------------------------
def init_params(key, n_token, d_embed, d_proj, cutoffs, div_val):
    cutoffs_full = list(cutoffs) + [n_token]
    cutoff_ends = [0] + cutoffs_full
    n_clusters = len(cutoffs_full) - 1

    keys = iter(jax.random.split(key, 32))
    init = lambda k, shape: 0.02 * jax.random.normal(k, shape, jnp.float32)

    params = {"out_projs": [], "out_layers": []}
    if n_clusters > 0:
        params["cluster_weight"] = init(next(keys), (n_clusters, d_embed))
        params["cluster_bias"] = init(next(keys), (n_clusters,))

    if div_val == 1:
        for _ in range(len(cutoffs_full)):
            if d_proj != d_embed:
                params["out_projs"].append(init(next(keys), (d_proj, d_embed)))
            else:
                params["out_projs"].append(None)
        params["out_layers"].append(
            {"weight": init(next(keys), (n_token, d_embed)),
             "bias": init(next(keys), (n_token,))})
    else:
        for i in range(len(cutoffs_full)):
            l, r = cutoff_ends[i], cutoff_ends[i + 1]
            d_emb_i = d_embed // (div_val ** i)
            params["out_projs"].append(init(next(keys), (d_proj, d_emb_i)))
            params["out_layers"].append(
                {"weight": init(next(keys), (r - l, d_emb_i)),
                 "bias": init(next(keys), (r - l,))})
    return params


# -----------------------------------------------------------------------------
# One-time parameter preparation (hoisted out of the forward):
#   per-cluster weight slicing + cluster row concat, transpose to [d_emb, V],
#   bf16 cast, vocab padding to a tile_v multiple (padded bias = -1e30).
# -----------------------------------------------------------------------------
def prepare_clusters(params, *, n_token, d_embed, d_proj, cutoffs, div_val,
                     tile_v=512):
    cutoffs_full = list(cutoffs) + [n_token]
    cutoff_ends = [0] + cutoffs_full
    n_clusters = len(cutoffs_full) - 1

    clusters = []
    for i in range(len(cutoffs_full)):
        if div_val == 1:
            l, r = cutoff_ends[i], cutoff_ends[i + 1]
            w = params["out_layers"][0]["weight"][l:r]
            b = params["out_layers"][0]["bias"][l:r]
        else:
            w = params["out_layers"][i]["weight"]
            b = params["out_layers"][i]["bias"]
        if i == 0 and n_clusters > 0:
            w = jnp.concatenate([w, params["cluster_weight"]], axis=0)
            b = jnp.concatenate([b, params["cluster_bias"]], axis=0)

        V, d_emb = w.shape
        tv = min(tile_v, _round_up(V, 128))      # lane-aligned vocab tile
        Vp = _round_up(V, tv)
        w_t = jnp.asarray(w, jnp.bfloat16).T                       # [d_emb, V]
        w_t = jnp.pad(w_t, ((0, 0), (0, Vp - V)))                  # zero cols
        b_p = jnp.pad(jnp.asarray(b, jnp.float32), (0, Vp - V),
                      constant_values=-1e30).reshape(1, Vp)        # mask pad cols
        p = params["out_projs"][i]
        p_bf = None if p is None else jnp.asarray(p, jnp.bfloat16)
        clusters.append(dict(weight_t=w_t, bias=b_p, proj=p_bf,
                             tile_v=tv, n_cols=V))

    return dict(clusters=clusters, cutoffs_full=cutoffs_full,
                cutoff_ends=cutoff_ends, n_clusters=n_clusters,
                head_size=cutoffs_full[0] + n_clusters)


# -----------------------------------------------------------------------------
# Forward pass (Pallas-backed)
# -----------------------------------------------------------------------------
def projected_adaptive_logsoftmax_forward(prepared, hidden, target, *,
                                          keep_order=False, tile_n=256):
    clusters = prepared["clusters"]
    cutoffs_full = prepared["cutoffs_full"]
    cutoff_ends = prepared["cutoff_ends"]
    n_clusters = prepared["n_clusters"]
    head_size = prepared["head_size"]

    target = target.astype(jnp.int32)
    hidden_bf = hidden.astype(jnp.bfloat16)          # bf16 MXU operands

    if n_clusters == 0:
        term = _cluster_logprob_gather(hidden_bf, clusters[0], target, None,
                                       tile_n=tile_n)
        return -term

    # Cluster id per token: 0 = shortlist, i = tail cluster i.
    boundaries = jnp.asarray(cutoffs_full[:-1], jnp.int32)
    cluster_id = jnp.searchsorted(boundaries, target, side="right").astype(jnp.int32)

    # Stable sort by cluster id: reproduces PyTorch's keep_order=False output
    # order and makes each tail cluster's rows contiguous so its kernel can
    # skip inactive row tiles.
    perm = jnp.argsort(cluster_id, stable=True)
    hidden_s = hidden_bf[perm]
    target_s = target[perm]
    cid_s = cluster_id[perm]

    # Head: gather target for shortlist rows, head column -i for tail rows.
    head_col = jnp.where(cid_s == 0, target_s, head_size - cid_s)
    total = _cluster_logprob_gather(hidden_s, clusters[0], head_col, None,
                                    tile_n=tile_n)

    # Tail clusters: only row tiles overlapping [start, end) do any work.
    for i in range(1, n_clusters + 1):
        l, r = cutoff_ends[i], cutoff_ends[i + 1]
        start = jnp.searchsorted(cid_s, i, side="left").astype(jnp.int32)
        end = jnp.searchsorted(cid_s, i, side="right").astype(jnp.int32)
        col_i = jnp.clip(target_s - l, 0, r - l - 1)
        term_i = _cluster_logprob_gather(hidden_s, clusters[i], col_i,
                                         (start, end), tile_n=tile_n)
        total = total + jnp.where(cid_s == i, term_i, 0.0)

    nll_sorted = -total
    if keep_order:
        return jnp.zeros_like(nll_sorted).at[perm].set(nll_sorted)
    return nll_sorted                                  # PyTorch contiguous-fill order


# -----------------------------------------------------------------------------
# Independent numpy reference (mirrors the PyTorch code path) for checking.
# -----------------------------------------------------------------------------
def reference_numpy(params, hidden, target, *, n_token, d_embed, d_proj,
                    cutoffs, div_val=1, keep_order=False):
    cutoffs_full = list(cutoffs) + [n_token]
    cutoff_ends = [0] + cutoffs_full
    n_clusters = len(cutoffs_full) - 1

    hidden = np.asarray(hidden, np.float32)
    target = np.asarray(target)

    def compute_logit(h, w, b, p):
        if p is not None:
            h = h @ np.asarray(p, np.float32)
        return h @ np.asarray(w, np.float32).T + np.asarray(b, np.float32)

    def log_softmax(x):
        m = x.max(-1, keepdims=True)
        return x - m - np.log(np.exp(x - m).sum(-1, keepdims=True))

    weights, biases, projs = [], [], []
    for i in range(len(cutoffs_full)):
        if div_val == 1:
            l, r = cutoff_ends[i], cutoff_ends[i + 1]
            w = np.asarray(params["out_layers"][0]["weight"])[l:r]
            b = np.asarray(params["out_layers"][0]["bias"])[l:r]
        else:
            w = np.asarray(params["out_layers"][i]["weight"])
            b = np.asarray(params["out_layers"][i]["bias"])
        if i == 0 and n_clusters > 0:
            w = np.concatenate([w, np.asarray(params["cluster_weight"])], 0)
            b = np.concatenate([b, np.asarray(params["cluster_bias"])], 0)
        weights.append(w); biases.append(b); projs.append(params["out_projs"][i])

    if n_clusters == 0:
        lp = log_softmax(compute_logit(hidden, weights[0], biases[0], projs[0]))
        return -lp[np.arange(len(target)), target]

    head_logprob = log_softmax(compute_logit(hidden, weights[0], biases[0], projs[0]))
    nll = np.zeros(len(target), np.float32)
    offset = 0
    cutoff_values = [0] + cutoffs_full
    for i in range(len(cutoff_values) - 1):
        l, r = cutoff_values[i], cutoff_values[i + 1]
        idx = np.nonzero((target >= l) & (target < r))[0]
        if idx.size == 0:
            continue
        t_i = target[idx] - l
        hlp_i = head_logprob[idx]
        if i == 0:
            lp = hlp_i[np.arange(len(idx)), t_i]
        else:
            tlp = log_softmax(compute_logit(hidden[idx], weights[i], biases[i], projs[i]))
            lp = hlp_i[:, -i] + tlp[np.arange(len(idx)), t_i]
        if keep_order:
            nll[idx] = -lp
        else:
            nll[offset:offset + len(idx)] = -lp
        offset += len(idx)
    return nll


# -----------------------------------------------------------------------------
if __name__ == "__main__":
    key = jax.random.PRNGKey(0)
    k1, k2 = jax.random.split(key)

    # Config 1: adaptive softmax, 2 tail clusters, div_val=2 (all projections)
    n_token, d_embed, d_proj = 40, 32, 32
    cutoffs = [16, 28]
    div_val = 2
    N = 64

    kp, kh, kt = jax.random.split(k1, 3)
    params = init_params(kp, n_token, d_embed, d_proj, cutoffs, div_val)
    prepared = prepare_clusters(params, n_token=n_token, d_embed=d_embed,
                                d_proj=d_proj, cutoffs=cutoffs, div_val=div_val)
    hidden = jax.random.normal(kh, (N, d_proj), jnp.float32)
    target = jax.random.randint(kt, (N,), 0, n_token, jnp.int32)

    for keep_order in (False, True):
        nll = projected_adaptive_logsoftmax_forward(
            prepared, hidden, target, keep_order=keep_order)
        nll = jax.block_until_ready(nll)
        ref = reference_numpy(params, hidden, target, n_token=n_token,
                              d_embed=d_embed, d_proj=d_proj, cutoffs=cutoffs,
                              div_val=div_val, keep_order=keep_order)
        np.testing.assert_allclose(np.asarray(nll), ref, rtol=3e-2, atol=3e-2)

    # Config 2: no clusters, no projection (plain streamed log-softmax path)
    n_token2, d2, N2 = 48, 32, 24
    kp2, kh2, kt2 = jax.random.split(k2, 3)
    params2 = init_params(kp2, n_token2, d2, d2, [], 1)
    prepared2 = prepare_clusters(params2, n_token=n_token2, d_embed=d2,
                                 d_proj=d2, cutoffs=[], div_val=1)
    hidden2 = jax.random.normal(kh2, (N2, d2), jnp.float32)
    target2 = jax.random.randint(kt2, (N2,), 0, n_token2, jnp.int32)
    nll2 = jax.block_until_ready(
        projected_adaptive_logsoftmax_forward(prepared2, hidden2, target2))
    ref2 = reference_numpy(params2, hidden2, target2, n_token=n_token2,
                           d_embed=d2, d_proj=d2, cutoffs=[], div_val=1)
    np.testing.assert_allclose(np.asarray(nll2), ref2, rtol=3e-2, atol=3e-2)

    print("KERNEL_OK")
</pallas_src>

<mosaic_0001>
module attributes {stable_mosaic.version = 11 : i64} {
  func.func @kernel(%arg0: i32, %arg1: i32, %arg2: memref<1xi32, #tpu.memory_space<smem>>, %arg3: memref<64x32xbf16, #tpu.memory_space<vmem>>, %arg4: memref<32x32xbf16, #tpu.memory_space<vmem>>, %arg5: memref<32x128xbf16, #tpu.memory_space<vmem>>, %arg6: memref<1x128xf32, #tpu.memory_space<vmem>>, %arg7: memref<64x1xi32, #tpu.memory_space<vmem>>, %arg8: memref<64x1xf32, #tpu.memory_space<vmem>>, %arg9: memref<64x32xbf16, #tpu.memory_space<vmem>>, %arg10: memref<64x1xf32, #tpu.memory_space<vmem>>, %arg11: memref<64x1xf32, #tpu.memory_space<vmem>>, %arg12: memref<64x1xf32, #tpu.memory_space<vmem>>) attributes {dimension_semantics = [#tpu.dimension_semantics<parallel>, #tpu.dimension_semantics<arbitrary>], iteration_bounds = array<i64: 1, 1>, scalar_prefetch = 1 : i64, scratch_operands = 4 : i64, tpu.core_type = #tpu.core_type<tc>, window_params = [{transform_indices = @transform_0, window_bounds = array<i64: 64, 32>}, {pipeline_mode = #tpu.pipeline_mode<synchronous>, transform_indices = @transform_1, window_bounds = array<i64: 32, 32>}, {transform_indices = @transform_2, window_bounds = array<i64: 32, 128>}, {transform_indices = @transform_3, window_bounds = array<i64: 1, 128>}, {transform_indices = @transform_4, window_bounds = array<i64: 64, 1>}, {transform_indices = @transform_5, window_bounds = array<i64: 64, 1>}]} {
    %0 = arith.index_cast %arg0 : i32 to index
    %1 = memref.load %arg2[%0] : memref<1xi32, #tpu.memory_space<smem>>
    %c0_i32 = arith.constant 0 : i32
    %2 = arith.cmpi sgt, %1, %c0_i32 : i32
    %3 = arith.extui %2 : i1 to i32
    %c0_i32_0 = arith.constant 0 : i32
    %4 = arith.cmpi ne, %3, %c0_i32_0 : i32
    scf.if %4 {
      %c0_i32_3 = arith.constant 0 : i32
      %8 = arith.cmpi eq, %arg1, %c0_i32_3 : i32
      %9 = arith.extui %8 : i1 to i32
      %c0_i32_4 = arith.constant 0 : i32
      %10 = arith.cmpi ne, %9, %c0_i32_4 : i32
      scf.if %10 {
        %cst_28 = arith.constant 0xFF800000 : f32
        %47 = vector.broadcast %cst_28 : f32 to vector<64x1xf32>
        %c0_29 = arith.constant 0 : index
        %c0_30 = arith.constant 0 : index
        %48 = vector.load %arg10[%c0_29, %c0_30] : memref<64x1xf32, #tpu.memory_space<vmem>>, vector<64x1xf32>
        tpu.vector_store %arg10[%c0_29, %c0_30], %47 {strides = array<i32>} : memref<64x1xf32, #tpu.memory_space<vmem>>, vector<64x1xf32>,
        %cst_31 = arith.constant 0.000000e+00 : f32
        %49 = vector.broadcast %cst_31 : f32 to vector<64x1xf32>
        %c0_32 = arith.constant 0 : index
        %c0_33 = arith.constant 0 : index
        %50 = vector.load %arg11[%c0_32, %c0_33] : memref<64x1xf32, #tpu.memory_space<vmem>>, vector<64x1xf32>
        tpu.vector_store %arg11[%c0_32, %c0_33], %49 {strides = array<i32>} : memref<64x1xf32, #tpu.memory_space<vmem>>, vector<64x1xf32>,
        %cst_34 = arith.constant 0.000000e+00 : f32
        %51 = vector.broadcast %cst_34 : f32 to vector<64x1xf32>
        %c0_35 = arith.constant 0 : index
        %c0_36 = arith.constant 0 : index
        %52 = vector.load %arg12[%c0_35, %c0_36] : memref<64x1xf32, #tpu.memory_space<vmem>>, vector<64x1xf32>
        tpu.vector_store %arg12[%c0_35, %c0_36], %51 {strides = array<i32>} : memref<64x1xf32, #tpu.memory_space<vmem>>, vector<64x1xf32>,
        %c0_37 = arith.constant 0 : index
        %c0_38 = arith.constant 0 : index
        %53 = vector.load %arg3[%c0_37, %c0_38] : memref<64x32xbf16, #tpu.memory_space<vmem>>, vector<64x32xbf16>
        %c0_39 = arith.constant 0 : index
        %c0_40 = arith.constant 0 : index
        %54 = vector.load %arg4[%c0_39, %c0_40] : memref<32x32xbf16, #tpu.memory_space<vmem>>, vector<32x32xbf16>
        %cst_41 = arith.constant dense<0.000000e+00> : vector<64x32xf32>
        %55 = tpu.matmul %53, %54, %cst_41 {dimension_numbers = #tpu.dot_dimension_numbers<[1], [0], [0], [1], [0, 0, 1, 1], [], []>} : vector<64x32xbf16>, vector<32x32xbf16>, vector<64x32xf32> -> vector<64x32xf32>
        %56 = arith.truncf %55 : vector<64x32xf32> to vector<64x32xbf16>
        %c0_42 = arith.constant 0 : index
        %c0_43 = arith.constant 0 : index
        %57 = vector.load %arg9[%c0_42, %c0_43] : memref<64x32xbf16, #tpu.memory_space<vmem>>, vector<64x32xbf16>
        tpu.vector_store %arg9[%c0_42, %c0_43], %56 {strides = array<i32>} : memref<64x32xbf16, #tpu.memory_space<vmem>>, vector<64x32xbf16>,
      } else {
      }
      %c0 = arith.constant 0 : index
      %c0_5 = arith.constant 0 : index
      %11 = vector.load %arg9[%c0, %c0_5] : memref<64x32xbf16, #tpu.memory_space<vmem>>, vector<64x32xbf16>
      %c0_6 = arith.constant 0 : index
      %c0_7 = arith.constant 0 : index
      %12 = vector.load %arg5[%c0_6, %c0_7] : memref<32x128xbf16, #tpu.memory_space<vmem>>, vector<32x128xbf16>
      %cst = arith.constant dense<0.000000e+00> : vector<64x128xf32>
      %13 = tpu.matmul %11, %12, %cst {dimension_numbers = #tpu.dot_dimension_numbers<[1], [0], [0], [1], [0, 0, 1, 1], [], []>} : vector<64x32xbf16>, vector<32x128xbf16>, vector<64x128xf32> -> vector<64x128xf32>
      %c0_8 = arith.constant 0 : index
      %c0_9 = arith.constant 0 : index
      %14 = vector.load %arg6[%c0_8, %c0_9] : memref<1x128xf32, #tpu.memory_space<vmem>>, vector<1x128xf32>
      %15 = vector.broadcast %14 : vector<1x128xf32> to vector<64x128xf32>
      %16 = arith.addf %13, %15 : vector<64x128xf32>
      %c0_10 = arith.constant 0 : index
      %c0_11 = arith.constant 0 : index
      %17 = vector.load %arg10[%c0_10, %c0_11] : memref<64x1xf32, #tpu.memory_space<vmem>>, vector<64x1xf32>
      %cst_12 = arith.constant dense<0xFF800000> : vector<64xf32>
      %18 = vector.multi_reduction <maximumf>, %16, %cst_12 [1] : vector<64x128xf32> to vector<64xf32>
      %19 = vector.shape_cast %18 : vector<64xf32> to vector<64x1xf32>
      %20 = arith.maximumf %17, %19 : vector<64x1xf32>
      %21 = arith.subf %17, %20 : vector<64x1xf32>
      %22 = math.exp %21 : vector<64x1xf32>
      %c0_13 = arith.constant 0 : index
      %c0_14 = arith.constant 0 : index
      %23 = vector.load %arg11[%c0_13, %c0_14] : memref<64x1xf32, #tpu.memory_space<vmem>>, vector<64x1xf32>
      %24 = arith.mulf %22, %23 : vector<64x1xf32>
      %25 = vector.broadcast %20 : vector<64x1xf32> to vector<64x128xf32>
      %26 = arith.subf %16, %25 : vector<64x128xf32>
      %27 = math.exp %26 : vector<64x128xf32>
      %cst_15 = arith.constant dense<0.000000e+00> : vector<64xf32>
      %28 = vector.multi_reduction <add>, %27, %cst_15 [1] : vector<64x128xf32> to vector<64xf32>
      %29 = vector.shape_cast %28 : vector<64xf32> to vector<64x1xf32>
      %30 = arith.addf %24, %29 : vector<64x1xf32>
      %c0_16 = arith.constant 0 : index
      %c0_17 = arith.constant 0 : index
      %31 = vector.load %arg11[%c0_16, %c0_17] : memref<64x1xf32, #tpu.memory_space<vmem>>, vector<64x1xf32>
      tpu.vector_store %arg11[%c0_16, %c0_17], %30 {strides = array<i32>} : memref<64x1xf32, #tpu.memory_space<vmem>>, vector<64x1xf32>,
      %c0_18 = arith.constant 0 : index
      %c0_19 = arith.constant 0 : index
      %32 = vector.load %arg10[%c0_18, %c0_19] : memref<64x1xf32, #tpu.memory_space<vmem>>, vector<64x1xf32>
      tpu.vector_store %arg10[%c0_18, %c0_19], %20 {strides = array<i32>} : memref<64x1xf32, #tpu.memory_space<vmem>>, vector<64x1xf32>,
      %33 = tpu.iota {dimensions = array<i32: 1>} : vector<64x128xi32>
      %c128_i32 = arith.constant 128 : i32
      %34 = arith.muli %arg1, %c128_i32 : i32
      %35 = vector.broadcast %34 : i32 to vector<64x128xi32>
      %36 = arith.addi %33, %35 : vector<64x128xi32>
      %c0_20 = arith.constant 0 : index
      %c0_21 = arith.constant 0 : index
      %37 = vector.load %arg12[%c0_20, %c0_21] : memref<64x1xf32, #tpu.memory_space<vmem>>, vector<64x1xf32>
      %c0_22 = arith.constant 0 : index
      %c0_23 = arith.constant 0 : index
      %38 = vector.load %arg7[%c0_22, %c0_23] : memref<64x1xi32, #tpu.memory_space<vmem>>, vector<64x1xi32>
      %39 = vector.broadcast %38 : vector<64x1xi32> to vector<64x128xi32>
      %40 = arith.cmpi eq, %36, %39 : vector<64x128xi32>
      %cst_24 = arith.constant 0.000000e+00 : f32
      %41 = vector.broadcast %cst_24 : f32 to vector<64x128xf32>
      %42 = arith.select %40, %16, %41 : vector<64x128xi1>, vector<64x128xf32>
      %cst_25 = arith.constant dense<0.000000e+00> : vector<64xf32>
      %43 = vector.multi_reduction <add>, %42, %cst_25 [1] : vector<64x128xf32> to vector<64xf32>
      %44 = vector.shape_cast %43 : vector<64xf32> to vector<64x1xf32>
      %45 = arith.addf %37, %44 : vector<64x1xf32>
      %c0_26 = arith.constant 0 : index
      %c0_27 = arith.constant 0 : index
      %46 = vector.load %arg12[%c0_26, %c0_27] : memref<64x1xf32, #tpu.memory_space<vmem>>, vector<64x1xf32>
      tpu.vector_store %arg12[%c0_26, %c0_27], %45 {strides = array<i32>} : memref<64x1xf32, #tpu.memory_space<vmem>>, vector<64x1xf32>,
    } else {
    }
    %c0_i32_1 = arith.constant 0 : i32
    %5 = arith.cmpi eq, %arg1, %c0_i32_1 : i32
    %6 = arith.extui %5 : i1 to i32
    %c0_i32_2 = arith.constant 0 : i32
    %7 = arith.cmpi ne, %6, %c0_i32_2 : i32
    scf.if %7 {
      %8 = arith.extui %2 : i1 to i32
      %c0_i32_3 = arith.constant 0 : i32
      %9 = arith.cmpi ne, %8, %c0_i32_3 : i32
      scf.if %9 {
        %c0 = arith.constant 0 : index
        %c0_5 = arith.constant 0 : index
        %13 = vector.load %arg12[%c0, %c0_5] : memref<64x1xf32, #tpu.memory_space<vmem>>, vector<64x1xf32>
        %c0_6 = arith.constant 0 : index
        %c0_7 = arith.constant 0 : index
        %14 = vector.load %arg10[%c0_6, %c0_7] : memref<64x1xf32, #tpu.memory_space<vmem>>, vector<64x1xf32>
        %c0_8 = arith.constant 0 : index
        %c0_9 = arith.constant 0 : index
        %15 = vector.load %arg11[%c0_8, %c0_9] : memref<64x1xf32, #tpu.memory_space<vmem>>, vector<64x1xf32>
        %16 = math.log %15 : vector<64x1xf32>
        %17 = arith.addf %14, %16 : vector<64x1xf32>
        %18 = arith.subf %13, %17 : vector<64x1xf32>
        %c0_10 = arith.constant 0 : index
        %c0_11 = arith.constant 0 : index
        %19 = vector.load %arg8[%c0_10, %c0_11] : memref<64x1xf32, #tpu.memory_space<vmem>>, vector<64x1xf32>
        tpu.vector_store %arg8[%c0_10, %c0_11], %18 {strides = array<i32>} : memref<64x1xf32, #tpu.memory_space<vmem>>, vector<64x1xf32>,
      } else {
      }
      %true = arith.constant true
      %10 = arith.xori %2, %true : i1
      %11 = arith.extui %10 : i1 to i32
      %c0_i32_4 = arith.constant 0 : i32
      %12 = arith.cmpi ne, %11, %c0_i32_4 : i32
      scf.if %12 {
        %cst = arith.constant 0.000000e+00 : f32
        %13 = vector.broadcast %cst : f32 to vector<64x1xf32>
        %c0 = arith.constant 0 : index
        %c0_5 = arith.constant 0 : index
        %14 = vector.load %arg8[%c0, %c0_5] : memref<64x1xf32, #tpu.memory_space<vmem>>, vector<64x1xf32>
        tpu.vector_store %arg8[%c0, %c0_5], %13 {strides = array<i32>} : memref<64x1xf32, #tpu.memory_space<vmem>>, vector<64x1xf32>,
      } else {
      }
    } else {
    }
    return
  }
  func.func @transform_0(%arg0: i32, %arg1: i32, %arg2: memref<1xi32, #tpu.memory_space<smem>>) -> (i32, i32) {
    %c0_i32 = arith.constant 0 : i32
    %c0_i32_0 = arith.constant 0 : i32
    return %arg0, %c0_i32 : i32, i32
  }
  func.func @transform_1(%arg0: i32, %arg1: i32, %arg2: memref<1xi32, #tpu.memory_space<smem>>) -> (i32, i32) {
    %c0_i32 = arith.constant 0 : i32
    %c0_i32_0 = arith.constant 0 : i32
    %c0_i32_1 = arith.constant 0 : i32
    return %c0_i32, %c0_i32_0 : i32, i32
  }
  func.func @transform_2(%arg0: i32, %arg1: i32, %arg2: memref<1xi32, #tpu.memory_space<smem>>) -> (i32, i32) {
    %0 = arith.index_cast %arg0 : i32 to index
    %1 = memref.load %arg2[%0] : memref<1xi32, #tpu.memory_space<smem>>
    %2 = arith.muli %arg1, %1 : i32
    %c0_i32 = arith.constant 0 : i32
    %c0_i32_0 = arith.constant 0 : i32
    return %c0_i32, %2 : i32, i32
  }
  func.func @transform_3(%arg0: i32, %arg1: i32, %arg2: memref<1xi32, #tpu.memory_space<smem>>) -> (i32, i32) {
    %0 = arith.index_cast %arg0 : i32 to index
    %1 = memref.load %arg2[%0] : memref<1xi32, #tpu.memory_space<smem>>
    %2 = arith.muli %arg1, %1 : i32
    %c0_i32 = arith.constant 0 : i32
    %c0_i32_0 = arith.constant 0 : i32
    return %c0_i32, %2 : i32, i32
  }
  func.func @transform_4(%arg0: i32, %arg1: i32, %arg2: memref<1xi32, #tpu.memory_space<smem>>) -> (i32, i32) {
    %c0_i32 = arith.constant 0 : i32
    %c0_i32_0 = arith.constant 0 : i32
    return %arg0, %c0_i32 : i32, i32
  }
  func.func @transform_5(%arg0: i32, %arg1: i32, %arg2: memref<1xi32, #tpu.memory_space<smem>>) -> (i32, i32) {
    %c0_i32 = arith.constant 0 : i32
    %c0_i32_0 = arith.constant 0 : i32
    return %arg0, %c0_i32 : i32, i32
  }
}

</mosaic_0001>

<llo_original>
// kernel: tpu_custom_call.1
$region0: #{tpu_custom_call.1}
  #allocation0 [shape = 'u32[]', space=smem, size = 0x4, offset = 0x4, fixed_abs, tag = 'smem constant byte address 0x4 - core index']
  #allocation1 [shape = 'u32[144,128]{1,0:T(1,128)}', space=vmem, size = 0x12000, scoped, tag = 'internal scratch']
  #allocation2 [shape = 'bf16[64,32]{1,0:T(16,128)(2,1)}', space=vmem, size = 0x4000, scoped, tag = 'scratch operand']
  #allocation3 [shape = 'f32[64,1]{1,0:T(8,128)}', space=vmem, size = 0x8000, scoped, tag = 'scratch operand']
  #allocation4 [shape = 'f32[64,1]{1,0:T(8,128)}', space=vmem, size = 0x8000, scoped, tag = 'scratch operand']
  #allocation5 [shape = 'f32[64,1]{1,0:T(8,128)}', space=vmem, size = 0x8000, scoped, tag = 'scratch operand']
  #allocation6 [shape = 's32[1]{0}', space=sflag, size = 0x4, scoped, tag = 'scoped memory for tpu_custom_call.1']
  #allocation7 [shape = 's32[1]{0:T(128)S(6)}', space=smem, size = 0x200, scoped, tag = 'prefetched SMEM operand 0']
  %s0 = inlined_call_operand.<no memory space> [shape: s32[1], index: 0, kind: input, shape index: {}]
  %s1 = inlined_call_operand.vmem [shape: bf16[64,32], index: 1, kind: input, shape index: {}]
  %s2 = inlined_call_operand.vmem [shape: bf16[32,32], index: 2, kind: input, shape index: {}]
  %s3 = inlined_call_operand.vmem [shape: bf16[32,128], index: 3, kind: input, shape index: {}]
  %s4 = inlined_call_operand.vmem [shape: f32[1,128], index: 4, kind: input, shape index: {}]
  %s5 = inlined_call_operand.vmem [shape: s32[64,1], index: 5, kind: input, shape index: {}]
  %s6 = inlined_call_operand.vmem [shape: f32[64,1], index: 6, kind: output, shape index: {}]
  %s7 = sld [smem:[#allocation0]]
  $region50: #{tpu_custom_call.1} parent=0
    _
  %s9 = ssub.s32 1, %s7
  %s10 = scalar_select 0, %s9, %s7
  %11 = sst [smem:[#allocation7]] %s0
  // Predicated region
  $region2: #{tpu_custom_call.1} parent=0 // pred_check
    _
  $region3: #{tpu_custom_call.1} parent=0 // pred_check_branch
    %13 = sbr.rel (0) target = $region5
  $region4: #{tpu_custom_call.1} parent=0 // pred_region
    _
  $region5: #{tpu_custom_call.1} parent=0 // pred_fallthru
    _
  // Predicated region
  $region6: #{tpu_custom_call.1} parent=0 // pred_check
    _
  $region7: #{tpu_custom_call.1} parent=0 // pred_check_branch
    %15 = sbr.rel (0) target = $region9
  $region8: #{tpu_custom_call.1} parent=0 // pred_region
    _
  $region9: #{tpu_custom_call.1} parent=0 // pred_fallthru
    _
  // Predicated region
  $region10: #{tpu_custom_call.1} parent=0 // pred_check
    _
  $region11: #{tpu_custom_call.1} parent=0 // pred_check_branch
    %17 = sbr.rel (0) target = $region13
  $region12: #{tpu_custom_call.1} parent=0 // pred_region
    %s18 = sld [smem:[#allocation7]]
    %s19 = smul.u32 0, %s18
    %p20 = scmp.lt.s32.totalorder %s19, 0
    %s21 = scalar_select %p20, %s19, 0
    %s22 = smul.addr %s21, 4
    %s23 = scalar_lea.vmem %s3, %s22
    %s24 = sld [smem:[#allocation7]]
    %s25 = smul.u32 0, %s24
  $region13: #{tpu_custom_call.1} parent=0 // pred_fallthru
    _
  // Predicated region
  $region14: #{tpu_custom_call.1} parent=0 // pred_check
    _
  $region15: #{tpu_custom_call.1} parent=0 // pred_check_branch
    %27 = sbr.rel (0) target = $region17
  $region16: #{tpu_custom_call.1} parent=0 // pred_region
    %s28 = sld [smem:[#allocation7]]
    %s29 = smul.u32 0, %s28
    %p30 = scmp.lt.s32.totalorder %s29, 0
    %s31 = scalar_select %p30, %s29, 0
    %s32 = scalar_lea.vmem %s4, %s31
    %s33 = sld [smem:[#allocation7]]
    %s34 = smul.u32 0, %s33
  $region17: #{tpu_custom_call.1} parent=0 // pred_fallthru
    _
  // Predicated region
  $region18: #{tpu_custom_call.1} parent=0 // pred_check
    _
  $region19: #{tpu_custom_call.1} parent=0 // pred_check_branch
    %36 = sbr.rel (0) target = $region21
  $region20: #{tpu_custom_call.1} parent=0 // pred_region
    _
  $region21: #{tpu_custom_call.1} parent=0 // pred_fallthru
    _
  %s37 = sld [smem:[#allocation7]]
  %s38 = smul.u32 0, %s37
  %p39 = scmp.lt.s32.totalorder %s38, 0
  %s40 = scalar_select %p39, %s38, 0
  %s41 = smul.addr %s40, 4
  %s42 = scalar_lea.vmem %s3, %s41
  %s43 = sld [smem:[#allocation7]]
  %s44 = smul.u32 0, %s43
  %p45 = scmp.lt.s32.totalorder %s44, 0
  %s46 = scalar_select %p45, %s44, 0
  %s47 = scalar_lea.vmem %s4, %s46
  %s48 = sld [smem:[#allocation7]]
  %s49 = smul.u32 0, %s48
  %p50 = scmp.lt.s32.totalorder %s49, 0
  %s51 = scalar_select %p50, %s49, 0
  %s52 = smul.addr %s51, 4
  %s53 = scalar_lea.vmem %s3, %s52
  %s54 = sld [smem:[#allocation7]]
  %s55 = smul.u32 0, %s54
  %s56 = sld [smem:[#allocation7]]
  %s57 = smul.u32 0, %s56
  %p58 = scmp.lt.s32.totalorder %s57, 0
  %s59 = scalar_select %p58, %s57, 0
  %s60 = scalar_lea.vmem %s4, %s59
  %s61 = sld [smem:[#allocation7]]
  %s62 = smul.u32 0, %s61
  %s64 = sld [smem:[#allocation7]]
  %p65 = scmp.gt.s32.totalorder %s64, 0
  // Predicated region
  $region22: #{tpu_custom_call.1} parent=0 // pred_check
    %p66 = pneg %p65
  $region23: #{tpu_custom_call.1} parent=0 // pred_check_branch
    %68 = sbr.rel (%p66) target = $region25
  $region24: #{tpu_custom_call.1} parent=0 // pred_region
    %p69 = scmp.eq.s32.totalorder 0, 0
    // Predicated region
    $region26: #{tpu_custom_call.1} parent=24 // pred_check
      %p70 = pneg %p69
    $region27: #{tpu_custom_call.1} parent=24 // pred_check_branch
      %72 = sbr.rel (%p70) target = $region29
    $region28: #{tpu_custom_call.1} parent=24 // pred_region
      %vm73 = vcmask 7168
      %74 = vst.msk [vmem:[#allocation3] sm:$0xff] %vm73, -inf
      %75 = vst.msk [vmem:[#allocation3 + $0x8] sm:$0xff] %vm73, -inf
      %76 = vst.msk [vmem:[#allocation3 + $0x10] sm:$0xff] %vm73, -inf
      %77 = vst.msk [vmem:[#allocation3 + $0x18] sm:$0xff] %vm73, -inf
      %78 = vst.msk [vmem:[#allocation3 + $0x20] sm:$0xff] %vm73, -inf
      %79 = vst.msk [vmem:[#allocation3 + $0x28] sm:$0xff] %vm73, -inf
      %80 = vst.msk [vmem:[#allocation3 + $0x30] sm:$0xff] %vm73, -inf
      %81 = vst.msk [vmem:[#allocation3 + $0x38] sm:$0xff] %vm73, -inf
      %82 = vst.msk [vmem:[#allocation4] sm:$0xff] %vm73, 0.0
      %83 = vst.msk [vmem:[#allocation4 + $0x8] sm:$0xff] %vm73, 0.0
      %84 = vst.msk [vmem:[#allocation4 + $0x10] sm:$0xff] %vm73, 0.0
      %85 = vst.msk [vmem:[#allocation4 + $0x18] sm:$0xff] %vm73, 0.0
      %86 = vst.msk [vmem:[#allocation4 + $0x20] sm:$0xff] %vm73, 0.0
      %87 = vst.msk [vmem:[#allocation4 + $0x28] sm:$0xff] %vm73, 0.0
      %88 = vst.msk [vmem:[#allocation4 + $0x30] sm:$0xff] %vm73, 0.0
      %89 = vst.msk [vmem:[#allocation4 + $0x38] sm:$0xff] %vm73, 0.0
      %90 = vst.msk [vmem:[#allocation5] sm:$0xff] %vm73, 0.0
      %91 = vst.msk [vmem:[#allocation5 + $0x8] sm:$0xff] %vm73, 0.0
      %92 = vst.msk [vmem:[#allocation5 + $0x10] sm:$0xff] %vm73, 0.0
      %93 = vst.msk [vmem:[#allocation5 + $0x18] sm:$0xff] %vm73, 0.0
      %94 = vst.msk [vmem:[#allocation5 + $0x20] sm:$0xff] %vm73, 0.0
      %95 = vst.msk [vmem:[#allocation5 + $0x28] sm:$0xff] %vm73, 0.0
      %96 = vst.msk [vmem:[#allocation5 + $0x30] sm:$0xff] %vm73, 0.0
      %97 = vst.msk [vmem:[#allocation5 + $0x38] sm:$0xff] %vm73, 0.0
      %v98 = vld [vmem:[%s1] sm:$0xf]
      %v99 = vld [vmem:[%s1 + $0x4] sm:$0xf]
      %v100 = vld [vmem:[%s1 + $0x8] sm:$0xf]
      %v101 = vld [vmem:[%s1 + $0xc] sm:$0xf]
      %v102 = vld [vmem:[%s1 + $0x10] sm:$0xf]
      %v103 = vld [vmem:[%s1 + $0x14] sm:$0xf]
      %v104 = vld [vmem:[%s1 + $0x18] sm:$0xf]
      %v105 = vld [vmem:[%s1 + $0x1c] sm:$0xf]
      %v106 = vld [vmem:[%s2] sm:$0xf]
      %v107 = vld [vmem:[%s2 + $0x4] sm:$0xf]
      %v108 = vld [vmem:[%s2 + $0x8] sm:$0xf]
      %v109 = vld [vmem:[%s2 + $0xc] sm:$0xf]
      %v118 = vunpack.c.l.b16 %v98
      %v119 = vunpack.c.l.b16 %v99
      %v120 = vunpack.c.l.b16 %v100
      %v121 = vunpack.c.l.b16 %v101
      %v122 = vunpack.c.l.b16 %v102
      %v123 = vunpack.c.l.b16 %v103
      %v124 = vunpack.c.l.b16 %v104
      %v125 = vunpack.c.l.b16 %v105
      %v126 = vpack.c.b16 %v119, %v118
      %v127 = vpack.c.b16 %v121, %v120
      %v128 = vpack.c.b16 %v123, %v122
      %v129 = vpack.c.b16 %v125, %v124
      %v134 = vunpack.c.l.b16 %v106
      %v135 = vunpack.c.l.b16 %v107
      %v136 = vunpack.c.l.b16 %v108
      %v137 = vunpack.c.l.b16 %v109
      %v138 = vpack.c.b16 %v135, %v134
      %v139 = vpack.c.b16 %v137, %v136
      %vm142 = vcmask 261120
      %v144 = vsel %vm142, %v126, 0
      %v147 = vsel %vm142, %v127, 0
      %v150 = vsel %vm142, %v128, 0
      %v153 = vsel %vm142, %v129, 0
      %155 = vmatprep.subr.bf16.mxu0 0
      %156 = vmatpush1.bf16.msra.mxu0 %v138
      %157 = vmatprep.subr.bf16.mxu0 0
      %158 = vmatpush1.bf16.msra.mxu0 %v139
      %159 = vmatprep.subr.bf16.mxu0 0
      %160 = vmatpush1.bf16.msra.mxu0 0
      %161 = vmatprep.subr.bf16.mxu0 0
      %162 = vmatpush1.bf16.msra.mxu0 0
      %163 = vmatprep.subr.bf16.mxu0 0
      %164 = vmatpush1.bf16.msra.mxu0 0
      %165 = vmatprep.subr.bf16.mxu0 0
      %166 = vmatpush1.bf16.msra.mxu0 0
      %167 = vmatprep.subr.bf16.mxu0 0
      %168 = vmatpush1.bf16.msra.mxu0 0
      %169 = vmatprep.subr.bf16.mxu0 0
      %170 = vmatpush1.bf16.msra.mxu0 0
      %171 = vmatprep.subr.bf16.mxu0 0
      %172 = vmatpush1.bf16.msra.mxu0 0
      %173 = vmatprep.subr.bf16.mxu0 0
      %174 = vmatpush1.bf16.msra.mxu0 0
      %175 = vmatprep.subr.bf16.mxu0 0
      %176 = vmatpush1.bf16.msra.mxu0 0
      %177 = vmatprep.subr.bf16.mxu0 0
      %178 = vmatpush1.bf16.msra.mxu0 0
      %179 = vmatprep.subr.bf16.mxu0 0
      %180 = vmatpush1.bf16.msra.mxu0 0
      %181 = vmatprep.subr.bf16.mxu0 0
      %182 = vmatpush1.bf16.msra.mxu0 0
      %183 = vmatprep.subr.bf16.mxu0 0
      %184 = vmatpush1.bf16.msra.mxu0 0
      %185 = vmatprep.subr.bf16.mxu0 0
      %186 = vmatpush1.bf16.msra.mxu0 0
      %187 = vmatprep.mubr.bf16.mxu0 0
      %188 = vmatmul.mubr.bf16.gmra.mrb[0].mxu0 %v144
      %v189 = vpop.f32.mrb[0].mxu0
      %v190 = vadd.f32 0.0, %v189
      %v191 = vpop.f32.mrb[0].mxu0
      %v192 = vpop.f32.mrb[0].mxu0
      %v193 = vadd.f32 0.0, %v192
      %v194 = vpop.f32.mrb[0].mxu0
      %195 = vmatprep.mubr.bf16.mxu0 0
      %196 = vmatmul.mubr.bf16.gmra.mrb[0].mxu0 %v147
      %v197 = vpop.f32.mrb[0].mxu0
      %v198 = vadd.f32 0.0, %v197
      %v199 = vpop.f32.mrb[0].mxu0
      %v200 = vpop.f32.mrb[0].mxu0
      %v201 = vadd.f32 0.0, %v200
      %v202 = vpop.f32.mrb[0].mxu0
      %203 = vmatprep.mubr.bf16.mxu0 0
      %204 = vmatmul.mubr.bf16.gmra.mrb[0].mxu0 %v150
      %v205 = vpop.f32.mrb[0].mxu0
      %v206 = vadd.f32 0.0, %v205
      %v207 = vpop.f32.mrb[0].mxu0
      %v208 = vpop.f32.mrb[0].mxu0
      %v209 = vadd.f32 0.0, %v208
      %v210 = vpop.f32.mrb[0].mxu0
      %211 = vmatprep.mubr.bf16.mxu0 0
      %212 = vmatmul.mubr.bf16.gmra.mrb[0].mxu0 %v153
      %v213 = vpop.f32.mrb[0].mxu0
      %v214 = vadd.f32 0.0, %v213
      %v215 = vpop.f32.mrb[0].mxu0
      %v216 = vpop.f32.mrb[0].mxu0
      %v217 = vadd.f32 0.0, %v216
      %v218 = vpop.f32.mrb[0].mxu0
      %219 = vdwg.mxu0
      %v220 = vpack.c.bf16 %v193, %v190
      %v221 = vpack.c.bf16 %v201, %v198
      %v222 = vpack.c.bf16 %v209, %v206
      %v223 = vpack.c.bf16 %v217, %v214
      %224 = vst.msk [vmem:[#allocation2] sm:$0xff] %vm142, %v220
      %225 = vst.msk [vmem:[#allocation2 + $0x8] sm:$0xff] %vm142, %v221
      %226 = vst.msk [vmem:[#allocation2 + $0x10] sm:$0xff] %vm142, %v222
      %227 = vst.msk [vmem:[#allocation2 + $0x18] sm:$0xff] %vm142, %v223
    $region29: #{tpu_custom_call.1} parent=24 // pred_fallthru
      _
    %v228 = vld [vmem:[#allocation2] sm:$0xff]
    %v229 = vld [vmem:[#allocation2 + $0x8] sm:$0xff]
    %v230 = vld [vmem:[#allocation2 + $0x10] sm:$0xff]
    %v231 = vld [vmem:[#allocation2 + $0x18] sm:$0xff]
    %v232 = vld [vmem:[%s53] sm:$0xf]
    %v233 = vld [vmem:[%s53 + $0x4] sm:$0xf]
    %v234 = vld [vmem:[%s53 + $0x8] sm:$0xf]
    %v235 = vld [vmem:[%s53 + $0xc] sm:$0xf]
    %v236 = vld [vmem:[%s60] sm:$0x1]
    %v238 = vlaneseq
    %v239 = vshrl.u32 %v238, 7
    %v240 = vsub.s32 0, %v239
    %v241 = vrot.slane %v236, %v240
    %v247 = vunpack.c.l.b16 %v232
    %v248 = vunpack.c.l.b16 %v233
    %v249 = vunpack.c.l.b16 %v234
    %v250 = vunpack.c.l.b16 %v235
    %v251 = vpack.c.b16 %v248, %v247
    %v252 = vpack.c.b16 %v250, %v249
    %vm255 = vcmask 261120
    %v257 = vsel %vm255, %v228, 0
    %v260 = vsel %vm255, %v229, 0
    %v263 = vsel %vm255, %v230, 0
    %v266 = vsel %vm255, %v231, 0
    %268 = vmatprep.subr.bf16.mxu0 0
    %269 = vmatpush1.bf16.msra.mxu0 %v251
    %270 = vmatprep.subr.bf16.mxu0 0
    %271 = vmatpush1.bf16.msra.mxu0 %v252
    %272 = vmatprep.subr.bf16.mxu0 0
    %273 = vmatpush1.bf16.msra.mxu0 0
    %274 = vmatprep.subr.bf16.mxu0 0
    %275 = vmatpush1.bf16.msra.mxu0 0
    %276 = vmatprep.subr.bf16.mxu0 0
    %277 = vmatpush1.bf16.msra.mxu0 0
    %278 = vmatprep.subr.bf16.mxu0 0
    %279 = vmatpush1.bf16.msra.mxu0 0
    %280 = vmatprep.subr.bf16.mxu0 0
    %281 = vmatpush1.bf16.msra.mxu0 0
    %282 = vmatprep.subr.bf16.mxu0 0
    %283 = vmatpush1.bf16.msra.mxu0 0
    %284 = vmatprep.subr.bf16.mxu0 0
    %285 = vmatpush1.bf16.msra.mxu0 0
    %286 = vmatprep.subr.bf16.mxu0 0
    %287 = vmatpush1.bf16.msra.mxu0 0
    %288 = vmatprep.subr.bf16.mxu0 0
    %289 = vmatpush1.bf16.msra.mxu0 0
    %290 = vmatprep.subr.bf16.mxu0 0
    %291 = vmatpush1.bf16.msra.mxu0 0
    %292 = vmatprep.subr.bf16.mxu0 0
    %293 = vmatpush1.bf16.msra.mxu0 0
    %294 = vmatprep.subr.bf16.mxu0 0
    %295 = vmatpush1.bf16.msra.mxu0 0
    %296 = vmatprep.subr.bf16.mxu0 0
    %297 = vmatpush1.bf16.msra.mxu0 0
    %298 = vmatprep.subr.bf16.mxu0 0
    %299 = vmatpush1.bf16.msra.mxu0 0
    %300 = vmatprep.mubr.bf16.mxu0 0
    %301 = vmatmul.mubr.bf16.gmra.mrb[0].mxu0 %v257
    %v302 = vpop.f32.mrb[0].mxu0
    %v303 = vadd.f32 %v241, %v302
    %v304 = vpop.f32.mrb[0].mxu0
    %v305 = vpop.f32.mrb[0].mxu0
    %v306 = vadd.f32 %v241, %v305
    %v307 = vpop.f32.mrb[0].mxu0
    %308 = vmatprep.mubr.bf16.mxu0 0
    %309 = vmatmul.mubr.bf16.gmra.mrb[0].mxu0 %v260
    %v310 = vpop.f32.mrb[0].mxu0
    %v311 = vadd.f32 %v241, %v310
    %v312 = vpop.f32.mrb[0].mxu0
    %v313 = vpop.f32.mrb[0].mxu0
    %v314 = vadd.f32 %v241, %v313
    %v315 = vpop.f32.mrb[0].mxu0
    %316 = vmatprep.mubr.bf16.mxu0 0
    %317 = vmatmul.mubr.bf16.gmra.mrb[0].mxu0 %v263
    %v318 = vpop.f32.mrb[0].mxu0
    %v319 = vadd.f32 %v241, %v318
    %v320 = vpop.f32.mrb[0].mxu0
    %v321 = vpop.f32.mrb[0].mxu0
    %v322 = vadd.f32 %v241, %v321
    %v323 = vpop.f32.mrb[0].mxu0
    %324 = vmatprep.mubr.bf16.mxu0 0
    %325 = vmatmul.mubr.bf16.gmra.mrb[0].mxu0 %v266
    %v326 = vpop.f32.mrb[0].mxu0
    %v327 = vadd.f32 %v241, %v326
    %v328 = vpop.f32.mrb[0].mxu0
    %v329 = vpop.f32.mrb[0].mxu0
    %v330 = vadd.f32 %v241, %v329
    %v331 = vpop.f32.mrb[0].mxu0
    %332 = vdwg.mxu0
    %v333 = vld [vmem:[#allocation3] sm:$0xff]
    %v334 = vld [vmem:[#allocation3 + $0x8] sm:$0xff]
    %v335 = vld [vmem:[#allocation3 + $0x10] sm:$0xff]
    %v336 = vld [vmem:[#allocation3 + $0x18] sm:$0xff]
    %v337 = vld [vmem:[#allocation3 + $0x20] sm:$0xff]
    %v338 = vld [vmem:[#allocation3 + $0x28] sm:$0xff]
    %v339 = vld [vmem:[#allocation3 + $0x30] sm:$0xff]
    %v340 = vld [vmem:[#allocation3 + $0x38] sm:$0xff]
    %341 = vmax.xlane.f32.xlu0 %v303
    %v342 = vpop.xlane.xlu0 %341
    %343 = vmax.xlane.f32.xlu0 %v306
    %v344 = vpop.xlane.xlu0 %343
    %345 = vmax.xlane.f32.xlu0 %v311
    %v346 = vpop.xlane.xlu0 %345
    %347 = vmax.xlane.f32.xlu0 %v314
    %v348 = vpop.xlane.xlu0 %347
    %349 = vmax.xlane.f32.xlu0 %v319
    %v350 = vpop.xlane.xlu0 %349
    %351 = vmax.xlane.f32.xlu0 %v322
    %v352 = vpop.xlane.xlu0 %351
    %353 = vmax.xlane.f32.xlu0 %v327
    %v354 = vpop.xlane.xlu0 %353
    %355 = vmax.xlane.f32.xlu0 %v330
    %v356 = vpop.xlane.xlu0 %355
    %v357 = vmax.f32 %v333, %v342
    %v358 = vmax.f32 %v334, %v344
    %v359 = vmax.f32 %v335, %v346
    %v360 = vmax.f32 %v336, %v348
    %v361 = vmax.f32 %v337, %v350
    %v362 = vmax.f32 %v338, %v352
    %v363 = vmax.f32 %v339, %v354
    %v364 = vmax.f32 %v340, %v356
    %v365 = vsub.f32 %v333, %v357
    %v366 = vsub.f32 %v334, %v358
    %v367 = vsub.f32 %v335, %v359
    %v368 = vsub.f32 %v336, %v360
    %v369 = vsub.f32 %v337, %v361
    %v370 = vsub.f32 %v338, %v362
    %v371 = vsub.f32 %v339, %v363
    %v372 = vsub.f32 %v340, %v364
    %v373 = vmul.f32 %v365, 1.442695
    %v374 = vpow.pop %v373
    %v375 = vmul.f32 %v366, 1.442695
    %v376 = vpow.pop %v375
    %v377 = vmul.f32 %v367, 1.442695
    %v378 = vpow.pop %v377
    %v379 = vmul.f32 %v368, 1.442695
    %v380 = vpow.pop %v379
    %v381 = vmul.f32 %v369, 1.442695
    %v382 = vpow.pop %v381
    %v383 = vmul.f32 %v370, 1.442695
    %v384 = vpow.pop %v383
    %v385 = vmul.f32 %v371, 1.442695
    %v386 = vpow.pop %v385
    %v387 = vmul.f32 %v372, 1.442695
    %v388 = vpow.pop %v387
    %v389 = vld [vmem:[#allocation4] sm:$0xff]
    %v390 = vld [vmem:[#allocation4 + $0x8] sm:$0xff]
    %v391 = vld [vmem:[#allocation4 + $0x10] sm:$0xff]
    %v392 = vld [vmem:[#allocation4 + $0x18] sm:$0xff]
    %v393 = vld [vmem:[#allocation4 + $0x20] sm:$0xff]
    %v394 = vld [vmem:[#allocation4 + $0x28] sm:$0xff]
    %v395 = vld [vmem:[#allocation4 + $0x30] sm:$0xff]
    %v396 = vld [vmem:[#allocation4 + $0x38] sm:$0xff]
    %v397 = vmul.f32 %v374, %v389
    %v398 = vmul.f32 %v376, %v390
    %v399 = vmul.f32 %v378, %v391
    %v400 = vmul.f32 %v380, %v392
    %v401 = vmul.f32 %v382, %v393
    %v402 = vmul.f32 %v384, %v394
    %v403 = vmul.f32 %v386, %v395
    %v404 = vmul.f32 %v388, %v396
    %406 = vset.pattern.permute.xlu0 0
    %407 = vperm.xlu0 %406, %v357
    %v408 = vpop.permute.xlu0 %407
    %411 = vset.pattern.permute.xlu0 0
    %412 = vperm.xlu0 %411, %v358
    %v413 = vpop.permute.xlu0 %412
    %416 = vset.pattern.permute.xlu0 0
    %417 = vperm.xlu0 %416, %v359
    %v418 = vpop.permute.xlu0 %417
    %421 = vset.pattern.permute.xlu0 0
    %422 = vperm.xlu0 %421, %v360
    %v423 = vpop.permute.xlu0 %422
    %426 = vset.pattern.permute.xlu0 0
    %427 = vperm.xlu0 %426, %v361
    %v428 = vpop.permute.xlu0 %427
    %431 = vset.pattern.permute.xlu0 0
    %432 = vperm.xlu0 %431, %v362
    %v433 = vpop.permute.xlu0 %432
    %436 = vset.pattern.permute.xlu0 0
    %437 = vperm.xlu0 %436, %v363
    %v438 = vpop.permute.xlu0 %437
    %441 = vset.pattern.permute.xlu0 0
    %442 = vperm.xlu0 %441, %v364
    %v443 = vpop.permute.xlu0 %442
    %v445 = vsub.f32 %v303, %v408
    %v446 = vsub.f32 %v306, %v413
    %v447 = vsub.f32 %v311, %v418
    %v448 = vsub.f32 %v314, %v423
    %v449 = vsub.f32 %v319, %v428
    %v450 = vsub.f32 %v322, %v433
    %v451 = vsub.f32 %v327, %v438
    %v452 = vsub.f32 %v330, %v443
    %v453 = vmul.f32 %v445, 1.442695
    %v454 = vpow.pop %v453
    %v455 = vmul.f32 %v446, 1.442695
    %v456 = vpow.pop %v455
    %v457 = vmul.f32 %v447, 1.442695
    %v458 = vpow.pop %v457
    %v459 = vmul.f32 %v448, 1.442695
    %v460 = vpow.pop %v459
    %v461 = vmul.f32 %v449, 1.442695
    %v462 = vpow.pop %v461
    %v463 = vmul.f32 %v450, 1.442695
    %v464 = vpow.pop %v463
    %v465 = vmul.f32 %v451, 1.442695
    %v466 = vpow.pop %v465
    %v467 = vmul.f32 %v452, 1.442695
    %v468 = vpow.pop %v467
    %469 = vadd.xlane.f32.xlu0 %v454
    %v470 = vpop.xlane.xlu0 %469
    %471 = vadd.xlane.f32.xlu0 %v456
    %v472 = vpop.xlane.xlu0 %471
    %473 = vadd.xlane.f32.xlu0 %v458
    %v474 = vpop.xlane.xlu0 %473
    %475 = vadd.xlane.f32.xlu0 %v460
    %v476 = vpop.xlane.xlu0 %475
    %477 = vadd.xlane.f32.xlu0 %v462
    %v478 = vpop.xlane.xlu0 %477
    %479 = vadd.xlane.f32.xlu0 %v464
    %v480 = vpop.xlane.xlu0 %479
    %481 = vadd.xlane.f32.xlu0 %v466
    %v482 = vpop.xlane.xlu0 %481
    %483 = vadd.xlane.f32.xlu0 %v468
    %v484 = vpop.xlane.xlu0 %483
    %v485 = vadd.f32 %v397, %v470
    %v486 = vadd.f32 %v398, %v472
    %v487 = vadd.f32 %v399, %v474
    %v488 = vadd.f32 %v400, %v476
    %v489 = vadd.f32 %v401, %v478
    %v490 = vadd.f32 %v402, %v480
    %v491 = vadd.f32 %v403, %v482
    %v492 = vadd.f32 %v404, %v484
    %vm493 = vcmask 7168
    %494 = vst.msk [vmem:[#allocation4] sm:$0xff] %vm493, %v485
    %495 = vst.msk [vmem:[#allocation4 + $0x8] sm:$0xff] %vm493, %v486
    %496 = vst.msk [vmem:[#allocation4 + $0x10] sm:$0xff] %vm493, %v487
    %497 = vst.msk [vmem:[#allocation4 + $0x18] sm:$0xff] %vm493, %v488
    %498 = vst.msk [vmem:[#allocation4 + $0x20] sm:$0xff] %vm493, %v489
    %499 = vst.msk [vmem:[#allocation4 + $0x28] sm:$0xff] %vm493, %v490
    %500 = vst.msk [vmem:[#allocation4 + $0x30] sm:$0xff] %vm493, %v491
    %501 = vst.msk [vmem:[#allocation4 + $0x38] sm:$0xff] %vm493, %v492
    %502 = vst.msk [vmem:[#allocation3] sm:$0xff] %vm493, %v357
    %503 = vst.msk [vmem:[#allocation3 + $0x8] sm:$0xff] %vm493, %v358
    %504 = vst.msk [vmem:[#allocation3 + $0x10] sm:$0xff] %vm493, %v359
    %505 = vst.msk [vmem:[#allocation3 + $0x18] sm:$0xff] %vm493, %v360
    %506 = vst.msk [vmem:[#allocation3 + $0x20] sm:$0xff] %vm493, %v361
    %507 = vst.msk [vmem:[#allocation3 + $0x28] sm:$0xff] %vm493, %v362
    %508 = vst.msk [vmem:[#allocation3 + $0x30] sm:$0xff] %vm493, %v363
    %509 = vst.msk [vmem:[#allocation3 + $0x38] sm:$0xff] %vm493, %v364
    %v510 = vlaneseq
    %v511 = vand.u32 %v510, 127
    %s512 = smul.u32 0, 128
    %v513 = vstv %s512
    %v514 = vadd.s32 %v511, %v513
    %v515 = vld [vmem:[#allocation5] sm:$0xff]
    %v516 = vld [vmem:[#allocation5 + $0x8] sm:$0xff]
    %v517 = vld [vmem:[#allocation5 + $0x10] sm:$0xff]
    %v518 = vld [vmem:[#allocation5 + $0x18] sm:$0xff]
    %v519 = vld [vmem:[#allocation5 + $0x20] sm:$0xff]
    %v520 = vld [vmem:[#allocation5 + $0x28] sm:$0xff]
    %v521 = vld [vmem:[#allocation5 + $0x30] sm:$0xff]
    %v522 = vld [vmem:[#allocation5 + $0x38] sm:$0xff]
    %v523 = vld [vmem:[%s5] sm:$0xff]
    %v524 = vld [vmem:[%s5 + $0x8] sm:$0xff]
    %v525 = vld [vmem:[%s5 + $0x10] sm:$0xff]
    %v526 = vld [vmem:[%s5 + $0x18] sm:$0xff]
    %v527 = vld [vmem:[%s5 + $0x20] sm:$0xff]
    %v528 = vld [vmem:[%s5 + $0x28] sm:$0xff]
    %v529 = vld [vmem:[%s5 + $0x30] sm:$0xff]
    %v530 = vld [vmem:[%s5 + $0x38] sm:$0xff]
    %531 = vset.pattern.permute.xlu0 0
    %532 = vperm.xlu0 %531, %v523
    %v533 = vpop.permute.xlu0 %532
    %534 = vset.pattern.permute.xlu0 0
    %535 = vperm.xlu0 %534, %v524
    %v536 = vpop.permute.xlu0 %535
    %537 = vset.pattern.permute.xlu0 0
    %538 = vperm.xlu0 %537, %v525
    %v539 = vpop.permute.xlu0 %538
    %540 = vset.pattern.permute.xlu0 0
    %541 = vperm.xlu0 %540, %v526
    %v542 = vpop.permute.xlu0 %541
    %543 = vset.pattern.permute.xlu0 0
    %544 = vperm.xlu0 %543, %v527
    %v545 = vpop.permute.xlu0 %544
    %546 = vset.pattern.permute.xlu0 0
    %547 = vperm.xlu0 %546, %v528
    %v548 = vpop.permute.xlu0 %547
    %549 = vset.pattern.permute.xlu0 0
    %550 = vperm.xlu0 %549, %v529
    %v551 = vpop.permute.xlu0 %550
    %552 = vset.pattern.permute.xlu0 0
    %553 = vperm.xlu0 %552, %v530
    %v554 = vpop.permute.xlu0 %553
    %vm555 = vcmp.eq.s32.totalorder %v514, %v533
    %vm556 = vcmp.eq.s32.totalorder %v514, %v536
    %vm557 = vcmp.eq.s32.totalorder %v514, %v539
    %vm558 = vcmp.eq.s32.totalorder %v514, %v542
    %vm559 = vcmp.eq.s32.totalorder %v514, %v545
    %vm560 = vcmp.eq.s32.totalorder %v514, %v548
    %vm561 = vcmp.eq.s32.totalorder %v514, %v551
    %vm562 = vcmp.eq.s32.totalorder %v514, %v554
    %v563 = vsel %vm555, %v303, 0.0
    %v564 = vsel %vm556, %v306, 0.0
    %v565 = vsel %vm557, %v311, 0.0
    %v566 = vsel %vm558, %v314, 0.0
    %v567 = vsel %vm559, %v319, 0.0
    %v568 = vsel %vm560, %v322, 0.0
    %v569 = vsel %vm561, %v327, 0.0
    %v570 = vsel %vm562, %v330, 0.0
    %571 = vadd.xlane.f32.xlu0 %v563
    %v572 = vpop.xlane.xlu0 %571
    %573 = vadd.xlane.f32.xlu0 %v564
    %v574 = vpop.xlane.xlu0 %573
    %575 = vadd.xlane.f32.xlu0 %v565
    %v576 = vpop.xlane.xlu0 %575
    %577 = vadd.xlane.f32.xlu0 %v566
    %v578 = vpop.xlane.xlu0 %577
    %579 = vadd.xlane.f32.xlu0 %v567
    %v580 = vpop.xlane.xlu0 %579
    %581 = vadd.xlane.f32.xlu0 %v568
    %v582 = vpop.xlane.xlu0 %581
    %583 = vadd.xlane.f32.xlu0 %v569
    %v584 = vpop.xlane.xlu0 %583
    %585 = vadd.xlane.f32.xlu0 %v570
    %v586 = vpop.xlane.xlu0 %585
    %v587 = vadd.f32 %v515, %v572
    %v588 = vadd.f32 %v516, %v574
    %v589 = vadd.f32 %v517, %v576
    %v590 = vadd.f32 %v518, %v578
    %v591 = vadd.f32 %v519, %v580
    %v592 = vadd.f32 %v520, %v582
    %v593 = vadd.f32 %v521, %v584
    %v594 = vadd.f32 %v522, %v586
    %595 = vst.msk [vmem:[#allocation5] sm:$0xff] %vm493, %v587
    %596 = vst.msk [vmem:[#allocation5 + $0x8] sm:$0xff] %vm493, %v588
    %597 = vst.msk [vmem:[#allocation5 + $0x10] sm:$0xff] %vm493, %v589
    %598 = vst.msk [vmem:[#allocation5 + $0x18] sm:$0xff] %vm493, %v590
    %599 = vst.msk [vmem:[#allocation5 + $0x20] sm:$0xff] %vm493, %v591
    %600 = vst.msk [vmem:[#allocation5 + $0x28] sm:$0xff] %vm493, %v592
    %601 = vst.msk [vmem:[#allocation5 + $0x30] sm:$0xff] %vm493, %v593
    %602 = vst.msk [vmem:[#allocation5 + $0x38] sm:$0xff] %vm493, %v594
  $region25: #{tpu_custom_call.1} parent=0 // pred_fallthru
    _
  %p603 = scmp.eq.s32.totalorder 0, 0
  // Predicated region
  $region30: #{tpu_custom_call.1} parent=0 // pred_check
    %p604 = pneg %p603
  $region31: #{tpu_custom_call.1} parent=0 // pred_check_branch
    %606 = sbr.rel (%p604) target = $region33
  $region32: #{tpu_custom_call.1} parent=0 // pred_region
    // Predicated region
    $region34: #{tpu_custom_call.1} parent=32 // pred_check
      %p607 = pneg %p65
    $region35: #{tpu_custom_call.1} parent=32 // pred_check_branch
      %609 = sbr.rel (%p607) target = $region37
    $region36: #{tpu_custom_call.1} parent=32 // pred_region
      %v610 = vld [vmem:[#allocation5] sm:$0xff]
      %v611 = vld [vmem:[#allocation5 + $0x8] sm:$0xff]
      %v612 = vld [vmem:[#allocation5 + $0x10] sm:$0xff]
      %v613 = vld [vmem:[#allocation5 + $0x18] sm:$0xff]
      %v614 = vld [vmem:[#allocation5 + $0x20] sm:$0xff]
      %v615 = vld [vmem:[#allocation5 + $0x28] sm:$0xff]
      %v616 = vld [vmem:[#allocation5 + $0x30] sm:$0xff]
      %v617 = vld [vmem:[#allocation5 + $0x38] sm:$0xff]
      %v618 = vld [vmem:[#allocation3] sm:$0xff]
      %v619 = vld [vmem:[#allocation3 + $0x8] sm:$0xff]
      %v620 = vld [vmem:[#allocation3 + $0x10] sm:$0xff]
      %v621 = vld [vmem:[#allocation3 + $0x18] sm:$0xff]
      %v622 = vld [vmem:[#allocation3 + $0x20] sm:$0xff]
      %v623 = vld [vmem:[#allocation3 + $0x28] sm:$0xff]
      %v624 = vld [vmem:[#allocation3 + $0x30] sm:$0xff]
      %v625 = vld [vmem:[#allocation3 + $0x38] sm:$0xff]
      %v626 = vld [vmem:[#allocation4] sm:$0xff]
      %v627 = vld [vmem:[#allocation4 + $0x8] sm:$0xff]
      %v628 = vld [vmem:[#allocation4 + $0x10] sm:$0xff]
      %v629 = vld [vmem:[#allocation4 + $0x18] sm:$0xff]
      %v630 = vld [vmem:[#allocation4 + $0x20] sm:$0xff]
      %v631 = vld [vmem:[#allocation4 + $0x28] sm:$0xff]
      %v632 = vld [vmem:[#allocation4 + $0x30] sm:$0xff]
      %v633 = vld [vmem:[#allocation4 + $0x38] sm:$0xff]
      %v634 = vlog2.pop %v626
      %v635 = vmul.f32 %v634, 0.6931472
      %v636 = vlog2.pop %v627
      %v637 = vmul.f32 %v636, 0.6931472
      %v638 = vlog2.pop %v628
      %v639 = vmul.f32 %v638, 0.6931472
      %v640 = vlog2.pop %v629
      %v641 = vmul.f32 %v640, 0.6931472
      %v642 = vlog2.pop %v630
      %v643 = vmul.f32 %v642, 0.6931472
      %v644 = vlog2.pop %v631
      %v645 = vmul.f32 %v644, 0.6931472
      %v646 = vlog2.pop %v632
      %v647 = vmul.f32 %v646, 0.6931472
      %v648 = vlog2.pop %v633
      %v649 = vmul.f32 %v648, 0.6931472
      %v650 = vadd.f32 %v618, %v635
      %v651 = vadd.f32 %v619, %v637
      %v652 = vadd.f32 %v620, %v639
      %v653 = vadd.f32 %v621, %v641
      %v654 = vadd.f32 %v622, %v643
      %v655 = vadd.f32 %v623, %v645
      %v656 = vadd.f32 %v624, %v647
      %v657 = vadd.f32 %v625, %v649
      %v658 = vsub.f32 %v610, %v650
      %v659 = vsub.f32 %v611, %v651
      %v660 = vsub.f32 %v612, %v652
      %v661 = vsub.f32 %v613, %v653
      %v662 = vsub.f32 %v614, %v654
      %v663 = vsub.f32 %v615, %v655
      %v664 = vsub.f32 %v616, %v656
      %v665 = vsub.f32 %v617, %v657
      %vm666 = vcmask 7168
      %667 = vst.msk [vmem:[%s6] sm:$0xff] %vm666, %v658
      %668 = vst.msk [vmem:[%s6 + $0x8] sm:$0xff] %vm666, %v659
      %669 = vst.msk [vmem:[%s6 + $0x10] sm:$0xff] %vm666, %v660
      %670 = vst.msk [vmem:[%s6 + $0x18] sm:$0xff] %vm666, %v661
      %671 = vst.msk [vmem:[%s6 + $0x20] sm:$0xff] %vm666, %v662
      %672 = vst.msk [vmem:[%s6 + $0x28] sm:$0xff] %vm666, %v663
      %673 = vst.msk [vmem:[%s6 + $0x30] sm:$0xff] %vm666, %v664
      %674 = vst.msk [vmem:[%s6 + $0x38] sm:$0xff] %vm666, %v665
    $region37: #{tpu_custom_call.1} parent=32 // pred_fallthru
      _
    %p675 = scmp.le.s32.totalorder %s64, 0
    // Predicated region
    $region38: #{tpu_custom_call.1} parent=32 // pred_check
      %p676 = pneg %p675
    $region39: #{tpu_custom_call.1} parent=32 // pred_check_branch
      %678 = sbr.rel (%p676) target = $region41
    $region40: #{tpu_custom_call.1} parent=32 // pred_region
      %vm679 = vcmask 7168
      %680 = vst.msk [vmem:[%s6] sm:$0xff] %vm679, 0.0
      %681 = vst.msk [vmem:[%s6 + $0x8] sm:$0xff] %vm679, 0.0
      %682 = vst.msk [vmem:[%s6 + $0x10] sm:$0xff] %vm679, 0.0
      %683 = vst.msk [vmem:[%s6 + $0x18] sm:$0xff] %vm679, 0.0
      %684 = vst.msk [vmem:[%s6 + $0x20] sm:$0xff] %vm679, 0.0
      %685 = vst.msk [vmem:[%s6 + $0x28] sm:$0xff] %vm679, 0.0
      %686 = vst.msk [vmem:[%s6 + $0x30] sm:$0xff] %vm679, 0.0
      %687 = vst.msk [vmem:[%s6 + $0x38] sm:$0xff] %vm679, 0.0
    $region41: #{tpu_custom_call.1} parent=32 // pred_fallthru
      _
  $region33: #{tpu_custom_call.1} parent=0 // pred_fallthru
    _
  // Predicated region
  $region42: #{tpu_custom_call.1} parent=0 // pred_check
    _
  $region43: #{tpu_custom_call.1} parent=0 // pred_check_branch
    %689 = sbr.rel (0) target = $region45
  $region44: #{tpu_custom_call.1} parent=0 // pred_region
    _
  $region45: #{tpu_custom_call.1} parent=0 // pred_fallthru
    _
  // Predicated region
  $region46: #{tpu_custom_call.1} parent=0 // pred_check
    _
  $region47: #{tpu_custom_call.1} parent=0 // pred_check_branch
    %691 = sbr.rel (0) target = $region49
  $region48: #{tpu_custom_call.1} parent=0 // pred_region
    _
  $region49: #{tpu_custom_call.1} parent=0 // pred_fallthru
    _

</llo_original>
